<compile_context>
chip_gen: v7x
topology: tpu7x:2x2x1
jax: 0.10.0
libtpu: 0.0.40
codegen_flags: <defaults>
</compile_context>

<pallas_src>
import functools

import jax
import jax.numpy as jnp
from jax import lax
from jax.experimental import pallas as pl
from jax.experimental.pallas import tpu as pltpu

EPS = 1e-5

_TILE_CANDIDATES = (4096, 2048, 1024, 512, 256, 128, 64, 32, 16, 8)


# ----------------------------------------------------------------------------
# Helpers
# ----------------------------------------------------------------------------
def _mosaic(semantics, vmem_estimate_bytes):
    limit = int(min(max(vmem_estimate_bytes + (8 << 20), 32 << 20), 48 << 20))
    return pltpu.CompilerParams(dimension_semantics=semantics,
                                vmem_limit_bytes=limit)


def _pick_tile_m(m, stream_row_bytes, resident_bytes, *,
                 max_rows=2048, vmem_budget=24 << 20):
    """Largest row tile whose honest VMEM footprint (2x double-buffered streamed
    blocks + 2x resident blocks) fits the budget; prefers exact divisors of m."""
    def fits(t):
        return 2 * t * stream_row_bytes + 2 * resident_bytes <= vmem_budget
    for t in _TILE_CANDIDATES:
        if t <= max_rows and t <= m and m % t == 0 and fits(t):
            return t
    for t in _TILE_CANDIDATES:
        if t <= max_rows and fits(t):
            return t
    return 8


def _pad_rows(x, rows):
    m = x.shape[0]
    return x if rows == m else jnp.pad(x, ((0, rows - m), (0, 0)))


def _row_spec(tm, c):
    return pl.BlockSpec((tm, c), lambda i: (i, 0))


def _stat_spec(c):
    return pl.BlockSpec((1, c), lambda i: (i, 0))


def _resident(shape):
    nd = len(shape)
    return pl.BlockSpec(shape, lambda i, _nd=nd: (0,) * _nd)


def _finalize_scale_shift(psum, pssq, gamma, beta, count):
    """Combine per-tile partial sums into bn(x) = x*scale + shift (biased var)."""
    mean = psum.sum(axis=0) / count
    var = jnp.maximum(pssq.sum(axis=0) / count - mean * mean, 0.0)  # clamp: no NaN
    scale = gamma.astype(jnp.float32) * lax.rsqrt(var + EPS)
    shift = beta.astype(jnp.float32) - mean * scale
    c = scale.shape[0]
    return scale.reshape(1, c), shift.reshape(1, c)


# ----------------------------------------------------------------------------
# Kernel 1: bn1 partial statistics (parallel grid over row tiles of x)
# ----------------------------------------------------------------------------
def _partial_stats_kernel(x_ref, sum_ref, ssq_ref):
    x = x_ref[...].astype(jnp.float32)
    sum_ref[...] = jnp.sum(x, axis=0, keepdims=True)
    ssq_ref[...] = jnp.sum(x * x, axis=0, keepdims=True)


def bn_partial_stats(x2d):
    m, c = x2d.shape
    tm = _pick_tile_m(m, c * x2d.dtype.itemsize + 2 * c * 4, 0)
    grid = (m + tm - 1) // tm
    xp = _pad_rows(x2d, grid * tm)          # zero pad rows: contribute 0 to sums
    est = 2 * tm * c * 4 + 8 * c * 4
    return pl.pallas_call(
        _partial_stats_kernel,
        grid=(grid,),
        out_shape=(jax.ShapeDtypeStruct((grid, c), jnp.float32),
                   jax.ShapeDtypeStruct((grid, c), jnp.float32)),
        in_specs=[_row_spec(tm, c)],
        out_specs=(_stat_spec(c), _stat_spec(c)),
        compiler_params=_mosaic(("parallel",), est),
    )(xp)


# ----------------------------------------------------------------------------
# Kernel 2: conv1 (1x1) fused with relu(bn1(.)) prologue + bn2 stats epilogue
# ----------------------------------------------------------------------------
def _conv1_kernel(x_ref, s_ref, t_ref, w_ref, y_ref, sum_ref, ssq_ref,
                  *, m_valid, tile_m):
    w = w_ref[...]
    pre = jnp.maximum(x_ref[...].astype(jnp.float32) * s_ref[...] + t_ref[...], 0.0)
    y = jnp.dot(pre.astype(w.dtype), w, preferred_element_type=jnp.float32)
    y_ref[...] = y.astype(y_ref.dtype)
    # bn2 partial stats; mask rows that exist only because of grid padding.
    row = pl.program_id(0) * tile_m + lax.broadcasted_iota(jnp.int32, (tile_m, 1), 0)
    ym = jnp.where(row < m_valid, y, 0.0)
    sum_ref[...] = jnp.sum(ym, axis=0, keepdims=True)
    ssq_ref[...] = jnp.sum(ym * ym, axis=0, keepdims=True)


def conv1_bn1relu(x2d, s1, t1, w1, out_dtype):
    m, cin = x2d.shape
    p = w1.shape[1]
    out_item = jnp.dtype(out_dtype).itemsize
    row_bytes = cin * 4 + p * out_item + 2 * p * 4
    res_bytes = w1.size * jnp.dtype(w1.dtype).itemsize + 2 * cin * 4
    tm = _pick_tile_m(m, row_bytes, res_bytes)
    grid = (m + tm - 1) // tm
    xp = _pad_rows(x2d, grid * tm)
    est = 2 * tm * row_bytes + 2 * res_bytes
    kernel = functools.partial(_conv1_kernel, m_valid=m, tile_m=tm)
    y1, ps, pq = pl.pallas_call(
        kernel,
        grid=(grid,),
        out_shape=(jax.ShapeDtypeStruct((grid * tm, p), out_dtype),
                   jax.ShapeDtypeStruct((grid, p), jnp.float32),
                   jax.ShapeDtypeStruct((grid, p), jnp.float32)),
        in_specs=[_row_spec(tm, cin), _resident((1, cin)), _resident((1, cin)),
                  _resident((cin, p))],
        out_specs=(_row_spec(tm, p), _stat_spec(p), _stat_spec(p)),
        compiler_params=_mosaic(("parallel",), est),
    )(xp, s1, t1, w1)
    return y1[:m], ps, pq


# ----------------------------------------------------------------------------
# Kernel 3: conv2 (3x3, pad 1, stride s) fully fused:
#   relu(bn2(.)) prologue -> zero-padded VMEM scratch -> 9 static-slice taps
#   accumulated as matmuls in f32 -> bn3 partial stats epilogue.
# ----------------------------------------------------------------------------
def _conv2_kernel(y_ref, s_ref, t_ref, w_ref, o_ref, sum_ref, ssq_ref,
                  ap_ref, acc_ref, *, stride, ho, wo, p):
    s2 = s_ref[...]
    t2 = t_ref[...]
    ap_ref[...] = jnp.zeros_like(ap_ref)          # conv zero-pad in post-act space
    if stride == 1:
        a = jnp.maximum(y_ref[0].astype(jnp.float32) * s2 + t2, 0.0)
        ap_ref[1:ho + 1, 1:wo + 1, :] = a.astype(ap_ref.dtype)

        def tap(di, dj):
            return ap_ref[di:di + ho, dj:dj + wo, :]
    else:
        # stride == 2: block is the phase-split view y[n, a, b, i, j, c] =
        # y1[n, 2i+a, 2j+b, c].  Fill a zero-padded phase scratch so that every
        # tap (di, dj) becomes a static unit-stride slice (no strided access).
        for qa in (0, 1):
            for qb in (0, 1):
                src = jnp.maximum(
                    y_ref[0, 1 - qa, 1 - qb].astype(jnp.float32) * s2 + t2, 0.0)
                r0 = 1 - qa
                c0 = 1 - qb
                ap_ref[qa, qb, r0:r0 + ho, c0:c0 + wo, :] = src.astype(ap_ref.dtype)

        def tap(di, dj):
            return ap_ref[di % 2, dj % 2,
                          di // 2:di // 2 + ho, dj // 2:dj // 2 + wo, :]

    acc_ref[...] = jnp.zeros_like(acc_ref)
    for di in range(3):
        for dj in range(3):
            v = tap(di, dj).reshape(ho * wo, p)
            acc_ref[...] += jnp.dot(v, w_ref[di * 3 + dj],
                                    preferred_element_type=jnp.float32)
    acc = acc_ref[...]
    o_ref[0] = acc.astype(o_ref.dtype)
    sum_ref[...] = jnp.sum(acc, axis=0, keepdims=True)      # bn3 partial stats
    ssq_ref[...] = jnp.sum(acc * acc, axis=0, keepdims=True)


def conv2_3x3(y1_img, s2, t2, w2_9pp, stride, out_dtype):
    n, h, w_sp, p = y1_img.shape
    assert stride in (1, 2), "ResNet only uses strides 1 and 2"
    ho = (h - 1) // stride + 1
    wo = (w_sp - 1) // stride + 1
    w_item = jnp.dtype(w2_9pp.dtype).itemsize
    if stride == 1:
        inp = y1_img
        in_block = (1, h, w_sp, p)
        ap_shape = (h + 2, w_sp + 2, p)
        ap_elems = (h + 2) * (w_sp + 2) * p
    else:
        assert h % 2 == 0 and w_sp % 2 == 0, "stride-2 conv2 needs even H, W"
        # TODO(synk): this phase transpose costs one extra pass over y1; an
        # in-kernel strided-ds gather would remove it.
        inp = jnp.transpose(y1_img.reshape(n, ho, 2, wo, 2, p), (0, 2, 4, 1, 3, 5))
        in_block = (1, 2, 2, ho, wo, p)
        ap_shape = (2, 2, ho + 1, wo + 1, p)
        ap_elems = 4 * (ho + 1) * (wo + 1) * p

    in_item = jnp.dtype(y1_img.dtype).itemsize
    out_item = jnp.dtype(out_dtype).itemsize
    est = (2 * h * w_sp * p * in_item + 2 * ho * wo * p * out_item
           + 2 * 9 * p * p * w_item + ap_elems * w_item + ho * wo * p * 4
           + (1 << 20))
    nblk = len(in_block)
    kernel = functools.partial(_conv2_kernel, stride=stride, ho=ho, wo=wo, p=p)
    y2, ps, pq = pl.pallas_call(
        kernel,
        grid=(n,),
        out_shape=(jax.ShapeDtypeStruct((n, ho * wo, p), out_dtype),
                   jax.ShapeDtypeStruct((n, p), jnp.float32),
                   jax.ShapeDtypeStruct((n, p), jnp.float32)),
        in_specs=[pl.BlockSpec(in_block, lambda i, _nd=nblk: (i,) + (0,) * (_nd - 1)),
                  _resident((1, p)), _resident((1, p)),
                  _resident((9, p, p))],
        out_specs=(pl.BlockSpec((1, ho * wo, p), lambda i: (i, 0, 0)),
                   _stat_spec(p), _stat_spec(p)),
        scratch_shapes=[pltpu.VMEM(ap_shape, w2_9pp.dtype),
                        pltpu.VMEM((ho * wo, p), jnp.float32)],
        compiler_params=_mosaic(("parallel",), est),
    )(inp, s2, t2, w2_9pp)
    return y2.reshape(n * ho * wo, p), ps, pq


# ----------------------------------------------------------------------------
# Kernel 4: conv3 (1x1) fused with relu(bn3(.)) + shortcut (proj / identity) add
# ----------------------------------------------------------------------------
def _final_proj_kernel(y2_ref, s3_ref, t3_ref, w3_ref, xs_ref, s1_ref, t1_ref,
                       wsc_ref, o_ref):
    w3 = w3_ref[...]
    wsc = wsc_ref[...]
    a = jnp.maximum(y2_ref[...].astype(jnp.float32) * s3_ref[...] + t3_ref[...], 0.0)
    sc = jnp.maximum(xs_ref[...].astype(jnp.float32) * s1_ref[...] + t1_ref[...], 0.0)
    o_ref[...] = (jnp.dot(a.astype(w3.dtype), w3, preferred_element_type=jnp.float32)
                  + jnp.dot(sc.astype(wsc.dtype), wsc,
                            preferred_element_type=jnp.float32)).astype(o_ref.dtype)


def _final_id_kernel(y2_ref, s3_ref, t3_ref, w3_ref, x_ref, s1_ref, t1_ref, o_ref):
    w3 = w3_ref[...]
    a = jnp.maximum(y2_ref[...].astype(jnp.float32) * s3_ref[...] + t3_ref[...], 0.0)
    sc = jnp.maximum(x_ref[...].astype(jnp.float32) * s1_ref[...] + t1_ref[...], 0.0)
    o_ref[...] = (jnp.dot(a.astype(w3.dtype), w3, preferred_element_type=jnp.float32)
                  + sc).astype(o_ref.dtype)


def conv3_add_shortcut(y2_2d, s3, t3, w3, short_2d, s1, t1, wsc):
    mo, p = y2_2d.shape
    cin = short_2d.shape[1]
    cout = w3.shape[1]
    w_item = jnp.dtype(w3.dtype).itemsize
    row_bytes = p * jnp.dtype(y2_2d.dtype).itemsize + cin * 4 + cout * 4
    res_bytes = (p * cout + (cin * cout if wsc is not None else 0)) * w_item \
        + 2 * (p + cin) * 4
    tm = _pick_tile_m(mo, row_bytes, res_bytes)
    grid = (mo + tm - 1) // tm
    mp = grid * tm
    y2p = _pad_rows(y2_2d, mp)
    shp = _pad_rows(short_2d, mp)
    est = 2 * tm * row_bytes + 2 * res_bytes
    if wsc is not None:
        out = pl.pallas_call(
            _final_proj_kernel,
            grid=(grid,),
            out_shape=jax.ShapeDtypeStruct((mp, cout), jnp.float32),
            in_specs=[_row_spec(tm, p), _resident((1, p)), _resident((1, p)),
                      _resident((p, cout)),
                      _row_spec(tm, cin), _resident((1, cin)), _resident((1, cin)),
                      _resident((cin, cout))],
            out_specs=_row_spec(tm, cout),
            compiler_params=_mosaic(("parallel",), est),
        )(y2p, s3, t3, w3, shp, s1, t1, wsc)
    else:
        out = pl.pallas_call(
            _final_id_kernel,
            grid=(grid,),
            out_shape=jax.ShapeDtypeStruct((mp, cout), jnp.float32),
            in_specs=[_row_spec(tm, p), _resident((1, p)), _resident((1, p)),
                      _resident((p, cout)),
                      _row_spec(tm, cin), _resident((1, cin)), _resident((1, cin))],
            out_specs=_row_spec(tm, cout),
            compiler_params=_mosaic(("parallel",), est),
        )(y2p, s3, t3, w3, shp, s1, t1)
    return out[:mo]


# ----------------------------------------------------------------------------
# PreActBottleneck forward
# ----------------------------------------------------------------------------
def preact_bottleneck_forward(x_nchw, params, stride, mm_dtype=jnp.bfloat16):
    """Forward of the given PyTorch PreActBottleneck (training-mode BN).
    mm_dtype sets MXU operand and inter-kernel activation dtype (bf16 default;
    float32 only for debugging)."""
    n, cin, h, w_sp = x_nchw.shape
    # TODO(synk): keep activations NHWC at the model level to drop these
    # per-block layout transposes.
    x_nhwc = jnp.transpose(x_nchw, (0, 2, 3, 1)).astype(jnp.float32)
    m = n * h * w_sp
    x2d = x_nhwc.reshape(m, cin)

    g1, b1 = params["bn1"]
    g2, b2 = params["bn2"]
    g3, b3 = params["bn3"]
    planes = params["w1"].shape[1]
    cout = params["w3"].shape[1]
    w1 = params["w1"].astype(mm_dtype)
    w2 = params["w2"].astype(mm_dtype).reshape(9, planes, planes)
    w3 = params["w3"].astype(mm_dtype)
    wsc = None if params["wsc"] is None else params["wsc"].astype(mm_dtype)

    # bn1: partial-sum reduction kernel (parallel axis) -> per-channel scale/shift
    ps1, pq1 = bn_partial_stats(x2d)
    s1, t1 = _finalize_scale_shift(ps1, pq1, g1, b1, m)

    # conv1 fused with relu(bn1(.)); bn2 stats in its epilogue
    y1, ps2, pq2 = conv1_bn1relu(x2d, s1, t1, w1, out_dtype=mm_dtype)
    s2, t2 = _finalize_scale_shift(ps2, pq2, g2, b2, m)

    # conv2 fused with relu(bn2(.)); bn3 stats in its epilogue
    y1_img = y1.reshape(n, h, w_sp, planes)
    y2_2d, ps3, pq3 = conv2_3x3(y1_img, s2, t2, w2, stride, out_dtype=mm_dtype)
    ho = (h - 1) // stride + 1
    wo = (w_sp - 1) // stride + 1
    mo = n * ho * wo
    s3, t3 = _finalize_scale_shift(ps3, pq3, g3, b3, mo)

    # conv3 fused with relu(bn3(.)) and the shortcut branch
    if wsc is not None:
        if stride == 1:
            xs = x2d
        else:
            # TODO(synk): fold the stride into the final kernel's BlockSpec
            # index_map instead of materializing the strided rows here.
            xs = x_nhwc[:, ::stride, ::stride, :].reshape(mo, cin)
        out2d = conv3_add_shortcut(y2_2d, s3, t3, w3, xs, s1, t1, wsc)
    else:
        # Identity shortcut adds relu(bn1(x)) — exactly self.shortcut(out).
        out2d = conv3_add_shortcut(y2_2d, s3, t3, w3, x2d, s1, t1, None)

    out = out2d.reshape(n, ho, wo, cout)
    return jnp.transpose(out, (0, 3, 1, 2)).astype(x_nchw.dtype)


# ----------------------------------------------------------------------------
# Pure-JAX reference (correctness check only)
# ----------------------------------------------------------------------------
def reference_forward(x_nchw, params, stride):
    def bn_relu_ref(x, gamma, beta):
        mean = x.mean(axis=(0, 1, 2), keepdims=True)
        var = ((x - mean) ** 2).mean(axis=(0, 1, 2), keepdims=True)
        return jnp.maximum((x - mean) * lax.rsqrt(var + EPS) * gamma + beta, 0.0)

    def conv(x, w_hwio, s, padding):
        return lax.conv_general_dilated(
            x, w_hwio, (s, s), padding, dimension_numbers=("NHWC", "HWIO", "NHWC"))

    x = jnp.transpose(x_nchw, (0, 2, 3, 1)).astype(jnp.float32)
    pre = bn_relu_ref(x, *params["bn1"])
    if params["wsc"] is not None:
        sc = conv(pre, params["wsc"].reshape(1, 1, *params["wsc"].shape), stride, "VALID")
    else:
        sc = pre
    t1 = conv(pre, params["w1"].reshape(1, 1, *params["w1"].shape), 1, "VALID")
    t2 = conv(bn_relu_ref(t1, *params["bn2"]), params["w2"], stride, [(1, 1), (1, 1)])
    t3 = conv(bn_relu_ref(t2, *params["bn3"]),
              params["w3"].reshape(1, 1, *params["w3"].shape), 1, "VALID")
    return jnp.transpose(t3 + sc, (0, 3, 1, 2))


# ----------------------------------------------------------------------------
def make_params(key, in_planes, planes, stride, expansion=4):
    ks = jax.random.split(key, 10)
    p = {
        "w1": 0.1 * jax.random.normal(ks[0], (in_planes, planes), jnp.float32),
        "w2": 0.1 * jax.random.normal(ks[1], (3, 3, planes, planes), jnp.float32),
        "w3": 0.1 * jax.random.normal(ks[2], (planes, expansion * planes), jnp.float32),
        "bn1": (1.0 + 0.1 * jax.random.normal(ks[3], (in_planes,), jnp.float32),
                0.1 * jax.random.normal(ks[4], (in_planes,), jnp.float32)),
        "bn2": (1.0 + 0.1 * jax.random.normal(ks[5], (planes,), jnp.float32),
                0.1 * jax.random.normal(ks[6], (planes,), jnp.float32)),
        "bn3": (1.0 + 0.1 * jax.random.normal(ks[7], (planes,), jnp.float32),
                0.1 * jax.random.normal(ks[8], (planes,), jnp.float32)),
    }
    if stride != 1 or in_planes != expansion * planes:
        p["wsc"] = 0.1 * jax.random.normal(
            ks[9], (in_planes, expansion * planes), jnp.float32)
    else:
        p["wsc"] = None
    return p


if __name__ == "__main__":
    expansion = 4
    N, H, W = 2, 16, 16
    configs = [           # (in_planes, planes, stride)
        (4, 4, 1),        # projection shortcut, stride 1
        (4, 4, 2),        # projection shortcut, stride 2
        (16, 4, 1),       # identity shortcut
    ]
    base_key = jax.random.PRNGKey(0)
    for idx, (in_planes, planes, stride) in enumerate(configs):
        kp, kx = jax.random.split(jax.random.fold_in(base_key, idx))
        params = make_params(kp, in_planes, planes, stride, expansion)
        x = jax.random.normal(kx, (N, in_planes, H, W), jnp.float32)
        ref = reference_forward(x, params, stride)
        ho = (H - 1) // stride + 1

        # f32 everywhere (debug mode): must track the reference tightly.
        out = jax.block_until_ready(
            preact_bottleneck_forward(x, params, stride, mm_dtype=jnp.float32))
        assert out.shape == ref.shape == (N, expansion * planes, ho, ho)
        err = float(jnp.max(jnp.abs(out - ref)))
        assert err < 1e-4, f"f32 mismatch (cfg {idx}): {err}"

        # default: bf16 MXU operands + bf16 inter-kernel activations.
        out_bf = jax.block_until_ready(preact_bottleneck_forward(x, params, stride))
        err_bf = float(jnp.max(jnp.abs(out_bf - ref)))
        assert err_bf < 2e-1, f"bf16 mismatch (cfg {idx}): {err_bf}"

    print("KERNEL_OK")
</pallas_src>

<mosaic_0001>
module attributes {stable_mosaic.version = 11 : i64} {
  func.func @_partial_stats_kernel(%arg0: i32, %arg1: memref<512x4xf32, #tpu.memory_space<vmem>>, %arg2: memref<1x4xf32, #tpu.memory_space<vmem>>, %arg3: memref<1x4xf32, #tpu.memory_space<vmem>>) attributes {dimension_semantics = [#tpu.dimension_semantics<parallel>], iteration_bounds = array<i64: 1>, scalar_prefetch = 0 : i64, scratch_operands = 0 : i64, tpu.core_type = #tpu.core_type<tc>, window_params = [{transform_indices = @transform_0, window_bounds = array<i64: 512, 4>}, {transform_indices = @transform_1, window_bounds = array<i64: 1, 4>}, {transform_indices = @transform_2, window_bounds = array<i64: 1, 4>}]} {
    %c0 = arith.constant 0 : index
    %c0_0 = arith.constant 0 : index
    %0 = vector.load %arg1[%c0, %c0_0] : memref<512x4xf32, #tpu.memory_space<vmem>>, vector<512x4xf32>
    %cst = arith.constant dense<0.000000e+00> : vector<4xf32>
    %1 = vector.multi_reduction <add>, %0, %cst [0] : vector<512x4xf32> to vector<4xf32>
    %2 = vector.shape_cast %1 : vector<4xf32> to vector<1x4xf32>
    %c0_1 = arith.constant 0 : index
    %c0_2 = arith.constant 0 : index
    %3 = vector.load %arg2[%c0_1, %c0_2] : memref<1x4xf32, #tpu.memory_space<vmem>>, vector<1x4xf32>
    tpu.vector_store %arg2[%c0_1, %c0_2], %2 {strides = array<i32>} : memref<1x4xf32, #tpu.memory_space<vmem>>, vector<1x4xf32>,
    %4 = arith.mulf %0, %0 : vector<512x4xf32>
    %cst_3 = arith.constant dense<0.000000e+00> : vector<4xf32>
    %5 = vector.multi_reduction <add>, %4, %cst_3 [0] : vector<512x4xf32> to vector<4xf32>
    %6 = vector.shape_cast %5 : vector<4xf32> to vector<1x4xf32>
    %c0_4 = arith.constant 0 : index
    %c0_5 = arith.constant 0 : index
    %7 = vector.load %arg3[%c0_4, %c0_5] : memref<1x4xf32, #tpu.memory_space<vmem>>, vector<1x4xf32>
    tpu.vector_store %arg3[%c0_4, %c0_5], %6 {strides = array<i32>} : memref<1x4xf32, #tpu.memory_space<vmem>>, vector<1x4xf32>,
    return
  }
  func.func @transform_0(%arg0: i32) -> (i32, i32) {
    %c0_i32 = arith.constant 0 : i32
    %c0_i32_0 = arith.constant 0 : i32
    return %arg0, %c0_i32 : i32, i32
  }
  func.func @transform_1(%arg0: i32) -> (i32, i32) {
    %c0_i32 = arith.constant 0 : i32
    %c0_i32_0 = arith.constant 0 : i32
    return %arg0, %c0_i32 : i32, i32
  }
  func.func @transform_2(%arg0: i32) -> (i32, i32) {
    %c0_i32 = arith.constant 0 : i32
    %c0_i32_0 = arith.constant 0 : i32
    return %arg0, %c0_i32 : i32, i32
  }
}

</mosaic_0001>

<llo_original>
// kernel: tpu_custom_call.1
$region0: #{tpu_custom_call.1}
  #allocation0 [shape = 'u32[]', space=smem, size = 0x4, offset = 0x4, fixed_abs, tag = 'smem constant byte address 0x4 - core index']
  #allocation1 [shape = 'u32[144,128]{1,0:T(1,128)}', space=vmem, size = 0x12000, scoped, tag = 'internal scratch']
  %s0 = inlined_call_operand.vmem [shape: f32[512,4], index: 0, kind: input, shape index: {}]
  %s1 = inlined_call_operand.hbm [shape: f32[1,4], index: 1, kind: output, shape index: {0}]
  %s2 = inlined_call_operand.hbm [shape: f32[1,4], index: 2, kind: output, shape index: {1}]
  %3 = xla_tuple %s1, %s2
  %s4 = sld [smem:[#allocation0]]
  $region22: #{tpu_custom_call.1} parent=0
    _
  %s6 = ssub.s32 1, %s4
  %s7 = scalar_select 0, %s6, %s4
  $region1: #{tpu_custom_call.1} parent=0
    #allocation2 [shape = 'u8[512]{0}', space=vmem, size = 0x400, scoped, tag = 'output window, operand 0, single buffered']
    #allocation3 [shape = 's32[1]{0}', space=sflag, size = 0x4, scoped, tag = 'scoped memory for tpu_custom_call.1']
    #allocation4 [shape = 'u8[512]{0}', space=vmem, size = 0x400, scoped, tag = 'output window, operand 1, single buffered']
    #allocation5 [shape = 's32[1]{0}', space=sflag, size = 0x4, scoped, tag = 'scoped memory for tpu_custom_call.1']
    %8 = vsyncpa [#allocation3], 0
    %9 = vsyncpa [#allocation5], 0
    // Predicated region
    $region2: #{tpu_custom_call.1} parent=1 // pred_check
      _
    $region3: #{tpu_custom_call.1} parent=1 // pred_check_branch
      %11 = sbr.rel (0) target = $region5
    $region4: #{tpu_custom_call.1} parent=1 // pred_region
      _
    $region5: #{tpu_custom_call.1} parent=1 // pred_fallthru
      _
    %v12 = vld [vmem:[%s0] sm:$0xff]
    %v13 = vld [vmem:[%s0 + $0x8] sm:$0xff]
    %v14 = vld [vmem:[%s0 + $0x10] sm:$0xff]
    %v15 = vld [vmem:[%s0 + $0x18] sm:$0xff]
    %v16 = vld [vmem:[%s0 + $0x20] sm:$0xff]
    %v17 = vld [vmem:[%s0 + $0x28] sm:$0xff]
    %v18 = vld [vmem:[%s0 + $0x30] sm:$0xff]
    %v19 = vld [vmem:[%s0 + $0x38] sm:$0xff]
    %v20 = vld [vmem:[%s0 + $0x40] sm:$0xff]
    %v21 = vld [vmem:[%s0 + $0x48] sm:$0xff]
    %v22 = vld [vmem:[%s0 + $0x50] sm:$0xff]
    %v23 = vld [vmem:[%s0 + $0x58] sm:$0xff]
    %v24 = vld [vmem:[%s0 + $0x60] sm:$0xff]
    %v25 = vld [vmem:[%s0 + $0x68] sm:$0xff]
    %v26 = vld [vmem:[%s0 + $0x70] sm:$0xff]
    %v27 = vld [vmem:[%s0 + $0x78] sm:$0xff]
    %v28 = vld [vmem:[%s0 + $0x80] sm:$0xff]
    %v29 = vld [vmem:[%s0 + $0x88] sm:$0xff]
    %v30 = vld [vmem:[%s0 + $0x90] sm:$0xff]
    %v31 = vld [vmem:[%s0 + $0x98] sm:$0xff]
    %v32 = vld [vmem:[%s0 + $0xa0] sm:$0xff]
    %v33 = vld [vmem:[%s0 + $0xa8] sm:$0xff]
    %v34 = vld [vmem:[%s0 + $0xb0] sm:$0xff]
    %v35 = vld [vmem:[%s0 + $0xb8] sm:$0xff]
    %v36 = vld [vmem:[%s0 + $0xc0] sm:$0xff]
    %v37 = vld [vmem:[%s0 + $0xc8] sm:$0xff]
    %v38 = vld [vmem:[%s0 + $0xd0] sm:$0xff]
    %v39 = vld [vmem:[%s0 + $0xd8] sm:$0xff]
    %v40 = vld [vmem:[%s0 + $0xe0] sm:$0xff]
    %v41 = vld [vmem:[%s0 + $0xe8] sm:$0xff]
    %v42 = vld [vmem:[%s0 + $0xf0] sm:$0xff]
    %v43 = vld [vmem:[%s0 + $0xf8] sm:$0xff]
    %v44 = vld [vmem:[%s0 + $0x100] sm:$0xff]
    %v45 = vld [vmem:[%s0 + $0x108] sm:$0xff]
    %v46 = vld [vmem:[%s0 + $0x110] sm:$0xff]
    %v47 = vld [vmem:[%s0 + $0x118] sm:$0xff]
    %v48 = vld [vmem:[%s0 + $0x120] sm:$0xff]
    %v49 = vld [vmem:[%s0 + $0x128] sm:$0xff]
    %v50 = vld [vmem:[%s0 + $0x130] sm:$0xff]
    %v51 = vld [vmem:[%s0 + $0x138] sm:$0xff]
    %v52 = vld [vmem:[%s0 + $0x140] sm:$0xff]
    %v53 = vld [vmem:[%s0 + $0x148] sm:$0xff]
    %v54 = vld [vmem:[%s0 + $0x150] sm:$0xff]
    %v55 = vld [vmem:[%s0 + $0x158] sm:$0xff]
    %v56 = vld [vmem:[%s0 + $0x160] sm:$0xff]
    %v57 = vld [vmem:[%s0 + $0x168] sm:$0xff]
    %v58 = vld [vmem:[%s0 + $0x170] sm:$0xff]
    %v59 = vld [vmem:[%s0 + $0x178] sm:$0xff]
    %v60 = vld [vmem:[%s0 + $0x180] sm:$0xff]
    %v61 = vld [vmem:[%s0 + $0x188] sm:$0xff]
    %v62 = vld [vmem:[%s0 + $0x190] sm:$0xff]
    %v63 = vld [vmem:[%s0 + $0x198] sm:$0xff]
    %v64 = vld [vmem:[%s0 + $0x1a0] sm:$0xff]
    %v65 = vld [vmem:[%s0 + $0x1a8] sm:$0xff]
    %v66 = vld [vmem:[%s0 + $0x1b0] sm:$0xff]
    %v67 = vld [vmem:[%s0 + $0x1b8] sm:$0xff]
    %v68 = vld [vmem:[%s0 + $0x1c0] sm:$0xff]
    %v69 = vld [vmem:[%s0 + $0x1c8] sm:$0xff]
    %v70 = vld [vmem:[%s0 + $0x1d0] sm:$0xff]
    %v71 = vld [vmem:[%s0 + $0x1d8] sm:$0xff]
    %v72 = vld [vmem:[%s0 + $0x1e0] sm:$0xff]
    %v73 = vld [vmem:[%s0 + $0x1e8] sm:$0xff]
    %v74 = vld [vmem:[%s0 + $0x1f0] sm:$0xff]
    %v75 = vld [vmem:[%s0 + $0x1f8] sm:$0xff]
    %vm76 = vcmask 31744
    %v77 = vsel %vm76, %v12, 0.0
    %v78 = vsel %vm76, %v13, 0.0
    %v79 = vadd.f32 %v77, %v78
    %v80 = vsel %vm76, %v14, 0.0
    %v81 = vadd.f32 %v79, %v80
    %v82 = vsel %vm76, %v15, 0.0
    %v83 = vadd.f32 %v81, %v82
    %v84 = vsel %vm76, %v16, 0.0
    %v85 = vadd.f32 %v83, %v84
    %v86 = vsel %vm76, %v17, 0.0
    %v87 = vadd.f32 %v85, %v86
    %v88 = vsel %vm76, %v18, 0.0
    %v89 = vadd.f32 %v87, %v88
    %v90 = vsel %vm76, %v19, 0.0
    %v91 = vadd.f32 %v89, %v90
    %v92 = vsel %vm76, %v20, 0.0
    %v93 = vadd.f32 %v91, %v92
    %v94 = vsel %vm76, %v21, 0.0
    %v95 = vadd.f32 %v93, %v94
    %v96 = vsel %vm76, %v22, 0.0
    %v97 = vadd.f32 %v95, %v96
    %v98 = vsel %vm76, %v23, 0.0
    %v99 = vadd.f32 %v97, %v98
    %v100 = vsel %vm76, %v24, 0.0
    %v101 = vadd.f32 %v99, %v100
    %v102 = vsel %vm76, %v25, 0.0
    %v103 = vadd.f32 %v101, %v102
    %v104 = vsel %vm76, %v26, 0.0
    %v105 = vadd.f32 %v103, %v104
    %v106 = vsel %vm76, %v27, 0.0
    %v107 = vadd.f32 %v105, %v106
    %v108 = vsel %vm76, %v28, 0.0
    %v109 = vadd.f32 %v107, %v108
    %v110 = vsel %vm76, %v29, 0.0
    %v111 = vadd.f32 %v109, %v110
    %v112 = vsel %vm76, %v30, 0.0
    %v113 = vadd.f32 %v111, %v112
    %v114 = vsel %vm76, %v31, 0.0
    %v115 = vadd.f32 %v113, %v114
    %v116 = vsel %vm76, %v32, 0.0
    %v117 = vadd.f32 %v115, %v116
    %v118 = vsel %vm76, %v33, 0.0
    %v119 = vadd.f32 %v117, %v118
    %v120 = vsel %vm76, %v34, 0.0
    %v121 = vadd.f32 %v119, %v120
    %v122 = vsel %vm76, %v35, 0.0
    %v123 = vadd.f32 %v121, %v122
    %v124 = vsel %vm76, %v36, 0.0
    %v125 = vadd.f32 %v123, %v124
    %v126 = vsel %vm76, %v37, 0.0
    %v127 = vadd.f32 %v125, %v126
    %v128 = vsel %vm76, %v38, 0.0
    %v129 = vadd.f32 %v127, %v128
    %v130 = vsel %vm76, %v39, 0.0
    %v131 = vadd.f32 %v129, %v130
    %v132 = vsel %vm76, %v40, 0.0
    %v133 = vadd.f32 %v131, %v132
    %v134 = vsel %vm76, %v41, 0.0
    %v135 = vadd.f32 %v133, %v134
    %v136 = vsel %vm76, %v42, 0.0
    %v137 = vadd.f32 %v135, %v136
    %v138 = vsel %vm76, %v43, 0.0
    %v139 = vadd.f32 %v137, %v138
    %v140 = vsel %vm76, %v44, 0.0
    %v141 = vadd.f32 %v139, %v140
    %v142 = vsel %vm76, %v45, 0.0
    %v143 = vadd.f32 %v141, %v142
    %v144 = vsel %vm76, %v46, 0.0
    %v145 = vadd.f32 %v143, %v144
    %v146 = vsel %vm76, %v47, 0.0
    %v147 = vadd.f32 %v145, %v146
    %v148 = vsel %vm76, %v48, 0.0
    %v149 = vadd.f32 %v147, %v148
    %v150 = vsel %vm76, %v49, 0.0
    %v151 = vadd.f32 %v149, %v150
    %v152 = vsel %vm76, %v50, 0.0
    %v153 = vadd.f32 %v151, %v152
    %v154 = vsel %vm76, %v51, 0.0
    %v155 = vadd.f32 %v153, %v154
    %v156 = vsel %vm76, %v52, 0.0
    %v157 = vadd.f32 %v155, %v156
    %v158 = vsel %vm76, %v53, 0.0
    %v159 = vadd.f32 %v157, %v158
    %v160 = vsel %vm76, %v54, 0.0
    %v161 = vadd.f32 %v159, %v160
    %v162 = vsel %vm76, %v55, 0.0
    %v163 = vadd.f32 %v161, %v162
    %v164 = vsel %vm76, %v56, 0.0
    %v165 = vadd.f32 %v163, %v164
    %v166 = vsel %vm76, %v57, 0.0
    %v167 = vadd.f32 %v165, %v166
    %v168 = vsel %vm76, %v58, 0.0
    %v169 = vadd.f32 %v167, %v168
    %v170 = vsel %vm76, %v59, 0.0
    %v171 = vadd.f32 %v169, %v170
    %v172 = vsel %vm76, %v60, 0.0
    %v173 = vadd.f32 %v171, %v172
    %v174 = vsel %vm76, %v61, 0.0
    %v175 = vadd.f32 %v173, %v174
    %v176 = vsel %vm76, %v62, 0.0
    %v177 = vadd.f32 %v175, %v176
    %v178 = vsel %vm76, %v63, 0.0
    %v179 = vadd.f32 %v177, %v178
    %v180 = vsel %vm76, %v64, 0.0
    %v181 = vadd.f32 %v179, %v180
    %v182 = vsel %vm76, %v65, 0.0
    %v183 = vadd.f32 %v181, %v182
    %v184 = vsel %vm76, %v66, 0.0
    %v185 = vadd.f32 %v183, %v184
    %v186 = vsel %vm76, %v67, 0.0
    %v187 = vadd.f32 %v185, %v186
    %v188 = vsel %vm76, %v68, 0.0
    %v189 = vadd.f32 %v187, %v188
    %v190 = vsel %vm76, %v69, 0.0
    %v191 = vadd.f32 %v189, %v190
    %v192 = vsel %vm76, %v70, 0.0
    %v193 = vadd.f32 %v191, %v192
    %v194 = vsel %vm76, %v71, 0.0
    %v195 = vadd.f32 %v193, %v194
    %v196 = vsel %vm76, %v72, 0.0
    %v197 = vadd.f32 %v195, %v196
    %v198 = vsel %vm76, %v73, 0.0
    %v199 = vadd.f32 %v197, %v198
    %v200 = vsel %vm76, %v74, 0.0
    %v201 = vadd.f32 %v199, %v200
    %v202 = vsel %vm76, %v75, 0.0
    %v203 = vadd.f32 %v201, %v202
    %v204 = vrot.slane %v203, 4
    %v205 = vadd.f32 %v203, %v204
    %v206 = vrot.slane %v205, 2
    %v207 = vadd.f32 %v205, %v206
    %v208 = vrot.slane %v207, 1
    %v209 = vadd.f32 %v207, %v208
    %vm210 = vcmask 24576
    %211 = vst.msk [vmem:[#allocation2] sm:$0x1] %vm210, %v209
    %v212 = vmul.f32 %v12, %v12
    %v213 = vmul.f32 %v13, %v13
    %v214 = vmul.f32 %v14, %v14
    %v215 = vmul.f32 %v15, %v15
    %v216 = vmul.f32 %v16, %v16
    %v217 = vmul.f32 %v17, %v17
    %v218 = vmul.f32 %v18, %v18
    %v219 = vmul.f32 %v19, %v19
    %v220 = vmul.f32 %v20, %v20
    %v221 = vmul.f32 %v21, %v21
    %v222 = vmul.f32 %v22, %v22
    %v223 = vmul.f32 %v23, %v23
    %v224 = vmul.f32 %v24, %v24
    %v225 = vmul.f32 %v25, %v25
    %v226 = vmul.f32 %v26, %v26
    %v227 = vmul.f32 %v27, %v27
    %v228 = vmul.f32 %v28, %v28
    %v229 = vmul.f32 %v29, %v29
    %v230 = vmul.f32 %v30, %v30
    %v231 = vmul.f32 %v31, %v31
    %v232 = vmul.f32 %v32, %v32
    %v233 = vmul.f32 %v33, %v33
    %v234 = vmul.f32 %v34, %v34
    %v235 = vmul.f32 %v35, %v35
    %v236 = vmul.f32 %v36, %v36
    %v237 = vmul.f32 %v37, %v37
    %v238 = vmul.f32 %v38, %v38
    %v239 = vmul.f32 %v39, %v39
    %v240 = vmul.f32 %v40, %v40
    %v241 = vmul.f32 %v41, %v41
    %v242 = vmul.f32 %v42, %v42
    %v243 = vmul.f32 %v43, %v43
    %v244 = vmul.f32 %v44, %v44
    %v245 = vmul.f32 %v45, %v45
    %v246 = vmul.f32 %v46, %v46
    %v247 = vmul.f32 %v47, %v47
    %v248 = vmul.f32 %v48, %v48
    %v249 = vmul.f32 %v49, %v49
    %v250 = vmul.f32 %v50, %v50
    %v251 = vmul.f32 %v51, %v51
    %v252 = vmul.f32 %v52, %v52
    %v253 = vmul.f32 %v53, %v53
    %v254 = vmul.f32 %v54, %v54
    %v255 = vmul.f32 %v55, %v55
    %v256 = vmul.f32 %v56, %v56
    %v257 = vmul.f32 %v57, %v57
    %v258 = vmul.f32 %v58, %v58
    %v259 = vmul.f32 %v59, %v59
    %v260 = vmul.f32 %v60, %v60
    %v261 = vmul.f32 %v61, %v61
    %v262 = vmul.f32 %v62, %v62
    %v263 = vmul.f32 %v63, %v63
    %v264 = vmul.f32 %v64, %v64
    %v265 = vmul.f32 %v65, %v65
    %v266 = vmul.f32 %v66, %v66
    %v267 = vmul.f32 %v67, %v67
    %v268 = vmul.f32 %v68, %v68
    %v269 = vmul.f32 %v69, %v69
    %v270 = vmul.f32 %v70, %v70
    %v271 = vmul.f32 %v71, %v71
    %v272 = vmul.f32 %v72, %v72
    %v273 = vmul.f32 %v73, %v73
    %v274 = vmul.f32 %v74, %v74
    %v275 = vmul.f32 %v75, %v75
    %v276 = vsel %vm76, %v212, 0.0
    %v277 = vsel %vm76, %v213, 0.0
    %v278 = vadd.f32 %v276, %v277
    %v279 = vsel %vm76, %v214, 0.0
    %v280 = vadd.f32 %v278, %v279
    %v281 = vsel %vm76, %v215, 0.0
    %v282 = vadd.f32 %v280, %v281
    %v283 = vsel %vm76, %v216, 0.0
    %v284 = vadd.f32 %v282, %v283
    %v285 = vsel %vm76, %v217, 0.0
    %v286 = vadd.f32 %v284, %v285
    %v287 = vsel %vm76, %v218, 0.0
    %v288 = vadd.f32 %v286, %v287
    %v289 = vsel %vm76, %v219, 0.0
    %v290 = vadd.f32 %v288, %v289
    %v291 = vsel %vm76, %v220, 0.0
    %v292 = vadd.f32 %v290, %v291
    %v293 = vsel %vm76, %v221, 0.0
    %v294 = vadd.f32 %v292, %v293
    %v295 = vsel %vm76, %v222, 0.0
    %v296 = vadd.f32 %v294, %v295
    %v297 = vsel %vm76, %v223, 0.0
    %v298 = vadd.f32 %v296, %v297
    %v299 = vsel %vm76, %v224, 0.0
    %v300 = vadd.f32 %v298, %v299
    %v301 = vsel %vm76, %v225, 0.0
    %v302 = vadd.f32 %v300, %v301
    %v303 = vsel %vm76, %v226, 0.0
    %v304 = vadd.f32 %v302, %v303
    %v305 = vsel %vm76, %v227, 0.0
    %v306 = vadd.f32 %v304, %v305
    %v307 = vsel %vm76, %v228, 0.0
    %v308 = vadd.f32 %v306, %v307
    %v309 = vsel %vm76, %v229, 0.0
    %v310 = vadd.f32 %v308, %v309
    %v311 = vsel %vm76, %v230, 0.0
    %v312 = vadd.f32 %v310, %v311
    %v313 = vsel %vm76, %v231, 0.0
    %v314 = vadd.f32 %v312, %v313
    %v315 = vsel %vm76, %v232, 0.0
    %v316 = vadd.f32 %v314, %v315
    %v317 = vsel %vm76, %v233, 0.0
    %v318 = vadd.f32 %v316, %v317
    %v319 = vsel %vm76, %v234, 0.0
    %v320 = vadd.f32 %v318, %v319
    %v321 = vsel %vm76, %v235, 0.0
    %v322 = vadd.f32 %v320, %v321
    %v323 = vsel %vm76, %v236, 0.0
    %v324 = vadd.f32 %v322, %v323
    %v325 = vsel %vm76, %v237, 0.0
    %v326 = vadd.f32 %v324, %v325
    %v327 = vsel %vm76, %v238, 0.0
    %v328 = vadd.f32 %v326, %v327
    %v329 = vsel %vm76, %v239, 0.0
    %v330 = vadd.f32 %v328, %v329
    %v331 = vsel %vm76, %v240, 0.0
    %v332 = vadd.f32 %v330, %v331
    %v333 = vsel %vm76, %v241, 0.0
    %v334 = vadd.f32 %v332, %v333
    %v335 = vsel %vm76, %v242, 0.0
    %v336 = vadd.f32 %v334, %v335
    %v337 = vsel %vm76, %v243, 0.0
    %v338 = vadd.f32 %v336, %v337
    %v339 = vsel %vm76, %v244, 0.0
    %v340 = vadd.f32 %v338, %v339
    %v341 = vsel %vm76, %v245, 0.0
    %v342 = vadd.f32 %v340, %v341
    %v343 = vsel %vm76, %v246, 0.0
    %v344 = vadd.f32 %v342, %v343
    %v345 = vsel %vm76, %v247, 0.0
    %v346 = vadd.f32 %v344, %v345
    %v347 = vsel %vm76, %v248, 0.0
    %v348 = vadd.f32 %v346, %v347
    %v349 = vsel %vm76, %v249, 0.0
    %v350 = vadd.f32 %v348, %v349
    %v351 = vsel %vm76, %v250, 0.0
    %v352 = vadd.f32 %v350, %v351
    %v353 = vsel %vm76, %v251, 0.0
    %v354 = vadd.f32 %v352, %v353
    %v355 = vsel %vm76, %v252, 0.0
    %v356 = vadd.f32 %v354, %v355
    %v357 = vsel %vm76, %v253, 0.0
    %v358 = vadd.f32 %v356, %v357
    %v359 = vsel %vm76, %v254, 0.0
    %v360 = vadd.f32 %v358, %v359
    %v361 = vsel %vm76, %v255, 0.0
    %v362 = vadd.f32 %v360, %v361
    %v363 = vsel %vm76, %v256, 0.0
    %v364 = vadd.f32 %v362, %v363
    %v365 = vsel %vm76, %v257, 0.0
    %v366 = vadd.f32 %v364, %v365
    %v367 = vsel %vm76, %v258, 0.0
    %v368 = vadd.f32 %v366, %v367
    %v369 = vsel %vm76, %v259, 0.0
    %v370 = vadd.f32 %v368, %v369
    %v371 = vsel %vm76, %v260, 0.0
    %v372 = vadd.f32 %v370, %v371
    %v373 = vsel %vm76, %v261, 0.0
    %v374 = vadd.f32 %v372, %v373
    %v375 = vsel %vm76, %v262, 0.0
    %v376 = vadd.f32 %v374, %v375
    %v377 = vsel %vm76, %v263, 0.0
    %v378 = vadd.f32 %v376, %v377
    %v379 = vsel %vm76, %v264, 0.0
    %v380 = vadd.f32 %v378, %v379
    %v381 = vsel %vm76, %v265, 0.0
    %v382 = vadd.f32 %v380, %v381
    %v383 = vsel %vm76, %v266, 0.0
    %v384 = vadd.f32 %v382, %v383
    %v385 = vsel %vm76, %v267, 0.0
    %v386 = vadd.f32 %v384, %v385
    %v387 = vsel %vm76, %v268, 0.0
    %v388 = vadd.f32 %v386, %v387
    %v389 = vsel %vm76, %v269, 0.0
    %v390 = vadd.f32 %v388, %v389
    %v391 = vsel %vm76, %v270, 0.0
    %v392 = vadd.f32 %v390, %v391
    %v393 = vsel %vm76, %v271, 0.0
    %v394 = vadd.f32 %v392, %v393
    %v395 = vsel %vm76, %v272, 0.0
    %v396 = vadd.f32 %v394, %v395
    %v397 = vsel %vm76, %v273, 0.0
    %v398 = vadd.f32 %v396, %v397
    %v399 = vsel %vm76, %v274, 0.0
    %v400 = vadd.f32 %v398, %v399
    %v401 = vsel %vm76, %v275, 0.0
    %v402 = vadd.f32 %v400, %v401
    %v403 = vrot.slane %v402, 4
    %v404 = vadd.f32 %v402, %v403
    %v405 = vrot.slane %v404, 2
    %v406 = vadd.f32 %v404, %v405
    %v407 = vrot.slane %v406, 1
    %v408 = vadd.f32 %v406, %v407
    %409 = vst.msk [vmem:[#allocation4] sm:$0x1] %vm210, %v408
    // Predicated region
    $region6: #{tpu_custom_call.1} parent=1 // pred_check
      _
    $region7: #{tpu_custom_call.1} parent=1 // pred_check_branch
      %411 = sbr.rel (0) target = $region9
    $region8: #{tpu_custom_call.1} parent=1 // pred_region
      %s413 = ssub.s32 16, 16
      %414 = vsyncadd [#allocation3], %s413
      %s416 = sshll.u32 [#allocation2], 4
      %s417 = int_to_ptr.vmem [resolvable:$true] %s416
      %419 = dma.vmem_to_hbm [thread:$0]  %s417, 16, %s1, [#allocation3]
    $region9: #{tpu_custom_call.1} parent=1 // pred_fallthru
      _
    // Predicated region
    $region10: #{tpu_custom_call.1} parent=1 // pred_check
      _
    $region11: #{tpu_custom_call.1} parent=1 // pred_check_branch
      %421 = sbr.rel (0) target = $region13
    $region12: #{tpu_custom_call.1} parent=1 // pred_region
      %s423 = ssub.s32 16, 16
      %424 = vsyncadd [#allocation5], %s423
      %s426 = sshll.u32 [#allocation4], 4
      %s427 = int_to_ptr.vmem [resolvable:$true] %s426
      %429 = dma.vmem_to_hbm [thread:$0]  %s427, 16, %s2, [#allocation5]
    $region13: #{tpu_custom_call.1} parent=1 // pred_fallthru
      _
    // Predicated region
    $region14: #{tpu_custom_call.1} parent=1 // pred_check
      _
    $region15: #{tpu_custom_call.1} parent=1 // pred_check_branch
      %431 = sbr.rel (0) target = $region17
    $region16: #{tpu_custom_call.1} parent=1 // pred_region
      %432 = dma.done [#allocation3], 16
    $region17: #{tpu_custom_call.1} parent=1 // pred_fallthru
      _
    // Predicated region
    $region18: #{tpu_custom_call.1} parent=1 // pred_check
      _
    $region19: #{tpu_custom_call.1} parent=1 // pred_check_branch
      %434 = sbr.rel (0) target = $region21
    $region20: #{tpu_custom_call.1} parent=1 // pred_region
      %435 = dma.done [#allocation5], 16
    $region21: #{tpu_custom_call.1} parent=1 // pred_fallthru
      _
    %436 = vsyncpa [#allocation3], 1
    %437 = vsyncpa [#allocation5], 1

</llo_original>
